<compile_context>
chip_gen: v7x
topology: tpu7x:2x2x1
jax: 0.10.0
libtpu: 0.0.40
codegen_flags: <defaults>
</compile_context>

<pallas_src>
import functools

import jax
import jax.numpy as jnp
from jax.experimental import pallas as pl
from jax.experimental.pallas import tpu as pltpu


def _head_kernel(x_ref, w_ref, b_ref, o_ref, acc_ref, *, hw_total, thw, inv_hw):
    # x_ref: (TN, THW, C)   w_ref: (C, Kp)   b_ref: (1, Kp)
    # o_ref: (TN, Kp)       acc_ref: (TN, C) f32 scratch
    j = pl.program_id(1)

    @pl.when(j == 0)
    def _():
        acc_ref[...] = jnp.zeros_like(acc_ref)

    x = x_ref[...]  # native dtype tile; no f32 copy materialized
    if hw_total % thw != 0:
        # Mask out-of-range HW rows of the last (overhanging) chunk.
        hw_idx = jax.lax.broadcasted_iota(jnp.int32, (1, thw, 1), 1)
        valid = (j * thw + hw_idx) < hw_total
        x = jnp.where(valid, x, jnp.zeros((), dtype=x.dtype))

    # Spatial-sum accumulation in f32 (AdaptiveAvgPool2d numerator).
    acc_ref[...] += jnp.sum(x, axis=1, dtype=jnp.float32)

    @pl.when(j == pl.num_programs(1) - 1)
    def _():
        pooled = acc_ref[...] * inv_hw               # mean over H*W, then flatten -> (TN, C)
        # Dropout(p=0.0) / eval mode is the identity.
        # TODO(synk): training-mode dropout (p>0) would need pltpu.prng_seed/prng_random_bits.
        out = jnp.dot(pooled, w_ref[...].astype(jnp.float32),
                      preferred_element_type=jnp.float32)   # FC on MXU
        out = out + b_ref[...].astype(jnp.float32)
        o_ref[...] = out.astype(o_ref.dtype)


def _choose_tiles(n, hw, c, itemsize, x_tile_bytes=4 * 1024 * 1024):
    """Pick (TN, THW) so a single x pipeline buffer is ~x_tile_bytes."""
    row_bytes = hw * c * itemsize                    # one full-HW sample slab
    if row_bytes <= x_tile_bytes:
        thw = hw                                     # full spatial extent per step
        tn = max(1, x_tile_bytes // row_bytes)
        if tn >= n:
            tn = n                                   # full batch (block == array dim)
        else:
            tn = min(n, max(8, (tn // 8) * 8))       # sublane-aligned batch tile
    else:
        tn = n if n < 8 else 8
        thw = max(8, (x_tile_bytes // (tn * c * itemsize)) // 8 * 8)
        thw = min(thw, hw)
    return tn, thw


def general_head_2d(x_nchw, weight, bias):
    """
    x_nchw : (N, C, H, W)
    weight : (num_classes, feature_dims)  -- PyTorch nn.Linear layout
    bias   : (num_classes,) or None
    returns: (N, num_classes)
    """
    N, C, H, W = x_nchw.shape
    K = weight.shape[0]
    assert weight.shape[1] == C
    HW = H * W

    # NHWC-flattened layout: C on the lane axis, HW on sublanes.
    x_flat = jnp.transpose(x_nchw, (0, 2, 3, 1)).reshape(N, HW, C)

    # FC params: transpose to (C, K) and pad K to a lane-dense multiple of 128.
    Kp = pl.cdiv(K, 128) * 128
    w_t = jnp.transpose(weight)                      # (C, K)
    if Kp != K:
        w_t = jnp.pad(w_t, ((0, 0), (0, Kp - K)))
    if bias is None:
        b2 = jnp.zeros((1, Kp), dtype=w_t.dtype)
    else:
        b2 = jnp.pad(bias, (0, Kp - K)).reshape(1, Kp)

    TN, THW = _choose_tiles(N, HW, C, x_flat.dtype.itemsize)
    grid = (pl.cdiv(N, TN), pl.cdiv(HW, THW))        # (batch tiles, HW chunks)

    kernel = functools.partial(_head_kernel, hw_total=HW, thw=THW, inv_hw=1.0 / HW)

    bytes_accessed = (N * HW * C * x_flat.dtype.itemsize
                      + C * Kp * w_t.dtype.itemsize
                      + N * Kp * x_flat.dtype.itemsize)

    out = pl.pallas_call(
        kernel,
        out_shape=jax.ShapeDtypeStruct((N, Kp), x_nchw.dtype),
        grid=grid,
        in_specs=[
            pl.BlockSpec((TN, THW, C), lambda i, j: (i, j, 0)),
            pl.BlockSpec((C, Kp), lambda i, j: (0, 0),
                         pipeline_mode=pl.Buffered(1)),   # resident, single-buffered
            pl.BlockSpec((1, Kp), lambda i, j: (0, 0),
                         pipeline_mode=pl.Buffered(1)),
        ],
        out_specs=pl.BlockSpec((TN, Kp), lambda i, j: (i, 0)),
        scratch_shapes=[pltpu.VMEM((TN, C), jnp.float32)],
        compiler_params=pltpu.CompilerParams(
            dimension_semantics=("parallel", "arbitrary"),
            vmem_limit_bytes=48 * 1024 * 1024),
        cost_estimate=pl.CostEstimate(
            flops=2 * N * C * K,
            transcendentals=0,
            bytes_accessed=bytes_accessed),
    )(x_flat, w_t, b2)

    return out[:, :K]


def reference(x_nchw, weight, bias):
    pooled = jnp.mean(x_nchw, axis=(2, 3))           # (N, C)
    return pooled @ weight.T + bias


if __name__ == "__main__":
    key = jax.random.PRNGKey(0)
    k_x, k_w = jax.random.split(key)

    # Small shapes consistent with the module: feature_dims=C, num_classes=K.
    N, C, H, W = 2, 32, 16, 16
    K = 16

    x = jax.random.normal(k_x, (N, C, H, W), dtype=jnp.float32)

    # Deterministic parameter init matching GeneralHead2D.init_weights():
    #   fc.weight ~ Normal(0, 0.01), fc.bias = 0
    weight = 0.01 * jax.random.normal(k_w, (K, C), dtype=jnp.float32)
    bias = jnp.zeros((K,), dtype=jnp.float32)

    out = jax.block_until_ready(general_head_2d(x, weight, bias))

    ref = reference(x, weight, bias)
    assert out.shape == (N, K)
    assert jnp.allclose(out, ref, atol=1e-5, rtol=1e-5), "mismatch vs reference"

    print("KERNEL_OK")
</pallas_src>

<mosaic_0001>
module attributes {stable_mosaic.version = 11 : i64} {
  func.func @_head_kernel(%arg0: i32, %arg1: i32, %arg2: memref<2x256x32xf32, #tpu.memory_space<vmem>>, %arg3: memref<32x128xf32, #tpu.memory_space<vmem>>, %arg4: memref<1x128xf32, #tpu.memory_space<vmem>>, %arg5: memref<2x128xf32, #tpu.memory_space<vmem>>, %arg6: memref<2x32xf32, #tpu.memory_space<vmem>>) attributes {dimension_semantics = [#tpu.dimension_semantics<parallel>, #tpu.dimension_semantics<arbitrary>], iteration_bounds = array<i64: 1, 1>, scalar_prefetch = 0 : i64, scratch_operands = 1 : i64, tpu.core_type = #tpu.core_type<tc>, window_params = [{transform_indices = @transform_0, window_bounds = array<i64: 2, 256, 32>}, {pipeline_mode = #tpu.pipeline_mode<synchronous>, transform_indices = @transform_1, window_bounds = array<i64: 32, 128>}, {pipeline_mode = #tpu.pipeline_mode<synchronous>, transform_indices = @transform_2, window_bounds = array<i64: 1, 128>}, {transform_indices = @transform_3, window_bounds = array<i64: 2, 128>}]} {
    %c0_i32 = arith.constant 0 : i32
    %0 = arith.cmpi eq, %arg1, %c0_i32 : i32
    %1 = arith.extui %0 : i1 to i32
    %c0_i32_0 = arith.constant 0 : i32
    %2 = arith.cmpi ne, %1, %c0_i32_0 : i32
    scf.if %2 {
      %cst_9 = arith.constant 0.000000e+00 : f32
      %11 = vector.broadcast %cst_9 : f32 to vector<2x32xf32>
      %c0_10 = arith.constant 0 : index
      %c0_11 = arith.constant 0 : index
      %12 = vector.load %arg6[%c0_10, %c0_11] : memref<2x32xf32, #tpu.memory_space<vmem>>, vector<2x32xf32>
      tpu.vector_store %arg6[%c0_10, %c0_11], %11 {strides = array<i32>} : memref<2x32xf32, #tpu.memory_space<vmem>>, vector<2x32xf32>,
    } else {
    }
    %c0 = arith.constant 0 : index
    %c0_1 = arith.constant 0 : index
    %c0_2 = arith.constant 0 : index
    %3 = vector.load %arg2[%c0, %c0_1, %c0_2] : memref<2x256x32xf32, #tpu.memory_space<vmem>>, vector<2x256x32xf32>
    %c0_3 = arith.constant 0 : index
    %c0_4 = arith.constant 0 : index
    %4 = vector.load %arg6[%c0_3, %c0_4] : memref<2x32xf32, #tpu.memory_space<vmem>>, vector<2x32xf32>
    %cst = arith.constant dense<0.000000e+00> : vector<2x32xf32>
    %5 = vector.multi_reduction <add>, %3, %cst [1] : vector<2x256x32xf32> to vector<2x32xf32>
    %6 = arith.addf %4, %5 : vector<2x32xf32>
    %c0_5 = arith.constant 0 : index
    %c0_6 = arith.constant 0 : index
    %7 = vector.load %arg6[%c0_5, %c0_6] : memref<2x32xf32, #tpu.memory_space<vmem>>, vector<2x32xf32>
    tpu.vector_store %arg6[%c0_5, %c0_6], %6 {strides = array<i32>} : memref<2x32xf32, #tpu.memory_space<vmem>>, vector<2x32xf32>,
    %c0_i32_7 = arith.constant 0 : i32
    %8 = arith.cmpi eq, %arg1, %c0_i32_7 : i32
    %9 = arith.extui %8 : i1 to i32
    %c0_i32_8 = arith.constant 0 : i32
    %10 = arith.cmpi ne, %9, %c0_i32_8 : i32
    scf.if %10 {
      %c0_9 = arith.constant 0 : index
      %c0_10 = arith.constant 0 : index
      %11 = vector.load %arg6[%c0_9, %c0_10] : memref<2x32xf32, #tpu.memory_space<vmem>>, vector<2x32xf32>
      %cst_11 = arith.constant 3.906250e-03 : f32
      %12 = vector.broadcast %cst_11 : f32 to vector<2x32xf32>
      %13 = arith.mulf %11, %12 : vector<2x32xf32>
      %c0_12 = arith.constant 0 : index
      %c0_13 = arith.constant 0 : index
      %14 = vector.load %arg3[%c0_12, %c0_13] : memref<32x128xf32, #tpu.memory_space<vmem>>, vector<32x128xf32>
      %cst_14 = arith.constant dense<0.000000e+00> : vector<2x128xf32>
      %15 = tpu.matmul %13, %14, %cst_14 {dimension_numbers = #tpu.dot_dimension_numbers<[1], [0], [0], [1], [0, 0, 1, 1], [], []>} : vector<2x32xf32>, vector<32x128xf32>, vector<2x128xf32> -> vector<2x128xf32>
      %c0_15 = arith.constant 0 : index
      %c0_16 = arith.constant 0 : index
      %16 = vector.load %arg4[%c0_15, %c0_16] : memref<1x128xf32, #tpu.memory_space<vmem>>, vector<1x128xf32>
      %17 = vector.broadcast %16 : vector<1x128xf32> to vector<2x128xf32>
      %18 = arith.addf %15, %17 : vector<2x128xf32>
      %c0_17 = arith.constant 0 : index
      %c0_18 = arith.constant 0 : index
      %19 = vector.load %arg5[%c0_17, %c0_18] : memref<2x128xf32, #tpu.memory_space<vmem>>, vector<2x128xf32>
      tpu.vector_store %arg5[%c0_17, %c0_18], %18 {strides = array<i32>} : memref<2x128xf32, #tpu.memory_space<vmem>>, vector<2x128xf32>,
    } else {
    }
    return
  }
  func.func @transform_0(%arg0: i32, %arg1: i32) -> (i32, i32, i32) {
    %c0_i32 = arith.constant 0 : i32
    %c0_i32_0 = arith.constant 0 : i32
    return %arg0, %arg1, %c0_i32 : i32, i32, i32
  }
  func.func @transform_1(%arg0: i32, %arg1: i32) -> (i32, i32) {
    %c0_i32 = arith.constant 0 : i32
    %c0_i32_0 = arith.constant 0 : i32
    %c0_i32_1 = arith.constant 0 : i32
    return %c0_i32, %c0_i32_0 : i32, i32
  }
  func.func @transform_2(%arg0: i32, %arg1: i32) -> (i32, i32) {
    %c0_i32 = arith.constant 0 : i32
    %c0_i32_0 = arith.constant 0 : i32
    %c0_i32_1 = arith.constant 0 : i32
    return %c0_i32, %c0_i32_0 : i32, i32
  }
  func.func @transform_3(%arg0: i32, %arg1: i32) -> (i32, i32) {
    %c0_i32 = arith.constant 0 : i32
    %c0_i32_0 = arith.constant 0 : i32
    return %arg0, %c0_i32 : i32, i32
  }
}

</mosaic_0001>

<llo_original>
// kernel: tpu_custom_call.1
$region0: #{tpu_custom_call.1}
  #allocation0 [shape = 'u32[]', space=smem, size = 0x4, offset = 0x4, fixed_abs, tag = 'smem constant byte address 0x4 - core index']
  #allocation1 [shape = 'u32[144,128]{1,0:T(1,128)}', space=vmem, size = 0x12000, scoped, tag = 'internal scratch']
  #allocation2 [shape = 'f32[2,32]{1,0:T(2,128)}', space=vmem, size = 0x400, scoped, tag = 'scratch operand']
  %s0 = inlined_call_operand.vmem [shape: f32[2,256,32], index: 0, kind: input, shape index: {}]
  %s1 = inlined_call_operand.vmem [shape: f32[32,128], index: 1, kind: input, shape index: {}]
  %s2 = inlined_call_operand.vmem [shape: f32[1,128], index: 2, kind: input, shape index: {}]
  %s3 = inlined_call_operand.hbm [shape: f32[2,128], index: 3, kind: output, shape index: {}]
  %s4 = sld [smem:[#allocation0]]
  $region30: #{tpu_custom_call.1} parent=0
    _
  %s6 = ssub.s32 1, %s4
  %s7 = scalar_select 0, %s6, %s4
  $region1: #{tpu_custom_call.1} parent=0
    #allocation3 [shape = 'u8[1024]{0}', space=vmem, size = 0x400, scoped, tag = 'output window, operand 0, single buffered']
    #allocation4 [shape = 's32[1]{0}', space=sflag, size = 0x4, scoped, tag = 'scoped memory for tpu_custom_call.1']
    %8 = vsyncpa [#allocation4], 0
    // Predicated region
    $region2: #{tpu_custom_call.1} parent=1 // pred_check
      _
    $region3: #{tpu_custom_call.1} parent=1 // pred_check_branch
      %10 = sbr.rel (0) target = $region5
    $region4: #{tpu_custom_call.1} parent=1 // pred_region
      _
    $region5: #{tpu_custom_call.1} parent=1 // pred_fallthru
      _
    // Predicated region
    $region6: #{tpu_custom_call.1} parent=1 // pred_check
      _
    $region7: #{tpu_custom_call.1} parent=1 // pred_check_branch
      %12 = sbr.rel (0) target = $region9
    $region8: #{tpu_custom_call.1} parent=1 // pred_region
      _
    $region9: #{tpu_custom_call.1} parent=1 // pred_fallthru
      _
    // Predicated region
    $region10: #{tpu_custom_call.1} parent=1 // pred_check
      _
    $region11: #{tpu_custom_call.1} parent=1 // pred_check_branch
      %14 = sbr.rel (0) target = $region13
    $region12: #{tpu_custom_call.1} parent=1 // pred_region
      _
    $region13: #{tpu_custom_call.1} parent=1 // pred_fallthru
      _
    %p15 = scmp.eq.s32.totalorder 0, 0
    // Predicated region
    $region14: #{tpu_custom_call.1} parent=1 // pred_check
      %p16 = pneg %p15
    $region15: #{tpu_custom_call.1} parent=1 // pred_check_branch
      %18 = sbr.rel (%p16) target = $region17
    $region16: #{tpu_custom_call.1} parent=1 // pred_region
      %vm19 = vcmask 254976
      %20 = vst.msk [vmem:[#allocation2] sm:$0x3] %vm19, 0.0
    $region17: #{tpu_custom_call.1} parent=1 // pred_fallthru
      _
    %v21 = vld [vmem:[%s0] sm:$0xff]
    %v22 = vld [vmem:[%s0 + $0x8] sm:$0xff]
    %v23 = vld [vmem:[%s0 + $0x10] sm:$0xff]
    %v24 = vld [vmem:[%s0 + $0x18] sm:$0xff]
    %v25 = vld [vmem:[%s0 + $0x20] sm:$0xff]
    %v26 = vld [vmem:[%s0 + $0x28] sm:$0xff]
    %v27 = vld [vmem:[%s0 + $0x30] sm:$0xff]
    %v28 = vld [vmem:[%s0 + $0x38] sm:$0xff]
    %v29 = vld [vmem:[%s0 + $0x40] sm:$0xff]
    %v30 = vld [vmem:[%s0 + $0x48] sm:$0xff]
    %v31 = vld [vmem:[%s0 + $0x50] sm:$0xff]
    %v32 = vld [vmem:[%s0 + $0x58] sm:$0xff]
    %v33 = vld [vmem:[%s0 + $0x60] sm:$0xff]
    %v34 = vld [vmem:[%s0 + $0x68] sm:$0xff]
    %v35 = vld [vmem:[%s0 + $0x70] sm:$0xff]
    %v36 = vld [vmem:[%s0 + $0x78] sm:$0xff]
    %v37 = vld [vmem:[%s0 + $0x80] sm:$0xff]
    %v38 = vld [vmem:[%s0 + $0x88] sm:$0xff]
    %v39 = vld [vmem:[%s0 + $0x90] sm:$0xff]
    %v40 = vld [vmem:[%s0 + $0x98] sm:$0xff]
    %v41 = vld [vmem:[%s0 + $0xa0] sm:$0xff]
    %v42 = vld [vmem:[%s0 + $0xa8] sm:$0xff]
    %v43 = vld [vmem:[%s0 + $0xb0] sm:$0xff]
    %v44 = vld [vmem:[%s0 + $0xb8] sm:$0xff]
    %v45 = vld [vmem:[%s0 + $0xc0] sm:$0xff]
    %v46 = vld [vmem:[%s0 + $0xc8] sm:$0xff]
    %v47 = vld [vmem:[%s0 + $0xd0] sm:$0xff]
    %v48 = vld [vmem:[%s0 + $0xd8] sm:$0xff]
    %v49 = vld [vmem:[%s0 + $0xe0] sm:$0xff]
    %v50 = vld [vmem:[%s0 + $0xe8] sm:$0xff]
    %v51 = vld [vmem:[%s0 + $0xf0] sm:$0xff]
    %v52 = vld [vmem:[%s0 + $0xf8] sm:$0xff]
    %v53 = vld [vmem:[%s0 + $0x100] sm:$0xff]
    %v54 = vld [vmem:[%s0 + $0x108] sm:$0xff]
    %v55 = vld [vmem:[%s0 + $0x110] sm:$0xff]
    %v56 = vld [vmem:[%s0 + $0x118] sm:$0xff]
    %v57 = vld [vmem:[%s0 + $0x120] sm:$0xff]
    %v58 = vld [vmem:[%s0 + $0x128] sm:$0xff]
    %v59 = vld [vmem:[%s0 + $0x130] sm:$0xff]
    %v60 = vld [vmem:[%s0 + $0x138] sm:$0xff]
    %v61 = vld [vmem:[%s0 + $0x140] sm:$0xff]
    %v62 = vld [vmem:[%s0 + $0x148] sm:$0xff]
    %v63 = vld [vmem:[%s0 + $0x150] sm:$0xff]
    %v64 = vld [vmem:[%s0 + $0x158] sm:$0xff]
    %v65 = vld [vmem:[%s0 + $0x160] sm:$0xff]
    %v66 = vld [vmem:[%s0 + $0x168] sm:$0xff]
    %v67 = vld [vmem:[%s0 + $0x170] sm:$0xff]
    %v68 = vld [vmem:[%s0 + $0x178] sm:$0xff]
    %v69 = vld [vmem:[%s0 + $0x180] sm:$0xff]
    %v70 = vld [vmem:[%s0 + $0x188] sm:$0xff]
    %v71 = vld [vmem:[%s0 + $0x190] sm:$0xff]
    %v72 = vld [vmem:[%s0 + $0x198] sm:$0xff]
    %v73 = vld [vmem:[%s0 + $0x1a0] sm:$0xff]
    %v74 = vld [vmem:[%s0 + $0x1a8] sm:$0xff]
    %v75 = vld [vmem:[%s0 + $0x1b0] sm:$0xff]
    %v76 = vld [vmem:[%s0 + $0x1b8] sm:$0xff]
    %v77 = vld [vmem:[%s0 + $0x1c0] sm:$0xff]
    %v78 = vld [vmem:[%s0 + $0x1c8] sm:$0xff]
    %v79 = vld [vmem:[%s0 + $0x1d0] sm:$0xff]
    %v80 = vld [vmem:[%s0 + $0x1d8] sm:$0xff]
    %v81 = vld [vmem:[%s0 + $0x1e0] sm:$0xff]
    %v82 = vld [vmem:[%s0 + $0x1e8] sm:$0xff]
    %v83 = vld [vmem:[%s0 + $0x1f0] sm:$0xff]
    %v84 = vld [vmem:[%s0 + $0x1f8] sm:$0xff]
    %v85 = vld [vmem:[#allocation2] sm:$0x3]
    %vm86 = vcmask 261120
    %v87 = vsel %vm86, %v21, 0.0
    %v88 = vsel %vm86, %v22, 0.0
    %v89 = vadd.f32 %v87, %v88
    %v90 = vsel %vm86, %v23, 0.0
    %v91 = vadd.f32 %v89, %v90
    %v92 = vsel %vm86, %v24, 0.0
    %v93 = vadd.f32 %v91, %v92
    %v94 = vsel %vm86, %v25, 0.0
    %v95 = vadd.f32 %v93, %v94
    %v96 = vsel %vm86, %v26, 0.0
    %v97 = vadd.f32 %v95, %v96
    %v98 = vsel %vm86, %v27, 0.0
    %v99 = vadd.f32 %v97, %v98
    %v100 = vsel %vm86, %v28, 0.0
    %v101 = vadd.f32 %v99, %v100
    %v102 = vsel %vm86, %v29, 0.0
    %v103 = vadd.f32 %v101, %v102
    %v104 = vsel %vm86, %v30, 0.0
    %v105 = vadd.f32 %v103, %v104
    %v106 = vsel %vm86, %v31, 0.0
    %v107 = vadd.f32 %v105, %v106
    %v108 = vsel %vm86, %v32, 0.0
    %v109 = vadd.f32 %v107, %v108
    %v110 = vsel %vm86, %v33, 0.0
    %v111 = vadd.f32 %v109, %v110
    %v112 = vsel %vm86, %v34, 0.0
    %v113 = vadd.f32 %v111, %v112
    %v114 = vsel %vm86, %v35, 0.0
    %v115 = vadd.f32 %v113, %v114
    %v116 = vsel %vm86, %v36, 0.0
    %v117 = vadd.f32 %v115, %v116
    %v118 = vsel %vm86, %v37, 0.0
    %v119 = vadd.f32 %v117, %v118
    %v120 = vsel %vm86, %v38, 0.0
    %v121 = vadd.f32 %v119, %v120
    %v122 = vsel %vm86, %v39, 0.0
    %v123 = vadd.f32 %v121, %v122
    %v124 = vsel %vm86, %v40, 0.0
    %v125 = vadd.f32 %v123, %v124
    %v126 = vsel %vm86, %v41, 0.0
    %v127 = vadd.f32 %v125, %v126
    %v128 = vsel %vm86, %v42, 0.0
    %v129 = vadd.f32 %v127, %v128
    %v130 = vsel %vm86, %v43, 0.0
    %v131 = vadd.f32 %v129, %v130
    %v132 = vsel %vm86, %v44, 0.0
    %v133 = vadd.f32 %v131, %v132
    %v134 = vsel %vm86, %v45, 0.0
    %v135 = vadd.f32 %v133, %v134
    %v136 = vsel %vm86, %v46, 0.0
    %v137 = vadd.f32 %v135, %v136
    %v138 = vsel %vm86, %v47, 0.0
    %v139 = vadd.f32 %v137, %v138
    %v140 = vsel %vm86, %v48, 0.0
    %v141 = vadd.f32 %v139, %v140
    %v142 = vsel %vm86, %v49, 0.0
    %v143 = vadd.f32 %v141, %v142
    %v144 = vsel %vm86, %v50, 0.0
    %v145 = vadd.f32 %v143, %v144
    %v146 = vsel %vm86, %v51, 0.0
    %v147 = vadd.f32 %v145, %v146
    %v148 = vsel %vm86, %v52, 0.0
    %v149 = vadd.f32 %v147, %v148
    %v150 = vrot.slane %v149, 4
    %v151 = vadd.f32 %v149, %v150
    %v152 = vrot.slane %v151, 2
    %v153 = vadd.f32 %v151, %v152
    %v154 = vrot.slane %v153, 1
    %v155 = vadd.f32 %v153, %v154
    %v156 = vsel %vm86, %v53, 0.0
    %v157 = vsel %vm86, %v54, 0.0
    %v158 = vadd.f32 %v156, %v157
    %v159 = vsel %vm86, %v55, 0.0
    %v160 = vadd.f32 %v158, %v159
    %v161 = vsel %vm86, %v56, 0.0
    %v162 = vadd.f32 %v160, %v161
    %v163 = vsel %vm86, %v57, 0.0
    %v164 = vadd.f32 %v162, %v163
    %v165 = vsel %vm86, %v58, 0.0
    %v166 = vadd.f32 %v164, %v165
    %v167 = vsel %vm86, %v59, 0.0
    %v168 = vadd.f32 %v166, %v167
    %v169 = vsel %vm86, %v60, 0.0
    %v170 = vadd.f32 %v168, %v169
    %v171 = vsel %vm86, %v61, 0.0
    %v172 = vadd.f32 %v170, %v171
    %v173 = vsel %vm86, %v62, 0.0
    %v174 = vadd.f32 %v172, %v173
    %v175 = vsel %vm86, %v63, 0.0
    %v176 = vadd.f32 %v174, %v175
    %v177 = vsel %vm86, %v64, 0.0
    %v178 = vadd.f32 %v176, %v177
    %v179 = vsel %vm86, %v65, 0.0
    %v180 = vadd.f32 %v178, %v179
    %v181 = vsel %vm86, %v66, 0.0
    %v182 = vadd.f32 %v180, %v181
    %v183 = vsel %vm86, %v67, 0.0
    %v184 = vadd.f32 %v182, %v183
    %v185 = vsel %vm86, %v68, 0.0
    %v186 = vadd.f32 %v184, %v185
    %v187 = vsel %vm86, %v69, 0.0
    %v188 = vadd.f32 %v186, %v187
    %v189 = vsel %vm86, %v70, 0.0
    %v190 = vadd.f32 %v188, %v189
    %v191 = vsel %vm86, %v71, 0.0
    %v192 = vadd.f32 %v190, %v191
    %v193 = vsel %vm86, %v72, 0.0
    %v194 = vadd.f32 %v192, %v193
    %v195 = vsel %vm86, %v73, 0.0
    %v196 = vadd.f32 %v194, %v195
    %v197 = vsel %vm86, %v74, 0.0
    %v198 = vadd.f32 %v196, %v197
    %v199 = vsel %vm86, %v75, 0.0
    %v200 = vadd.f32 %v198, %v199
    %v201 = vsel %vm86, %v76, 0.0
    %v202 = vadd.f32 %v200, %v201
    %v203 = vsel %vm86, %v77, 0.0
    %v204 = vadd.f32 %v202, %v203
    %v205 = vsel %vm86, %v78, 0.0
    %v206 = vadd.f32 %v204, %v205
    %v207 = vsel %vm86, %v79, 0.0
    %v208 = vadd.f32 %v206, %v207
    %v209 = vsel %vm86, %v80, 0.0
    %v210 = vadd.f32 %v208, %v209
    %v211 = vsel %vm86, %v81, 0.0
    %v212 = vadd.f32 %v210, %v211
    %v213 = vsel %vm86, %v82, 0.0
    %v214 = vadd.f32 %v212, %v213
    %v215 = vsel %vm86, %v83, 0.0
    %v216 = vadd.f32 %v214, %v215
    %v217 = vsel %vm86, %v84, 0.0
    %v218 = vadd.f32 %v216, %v217
    %v219 = vrot.slane %v218, 4
    %v220 = vadd.f32 %v218, %v219
    %v221 = vrot.slane %v220, 2
    %v222 = vadd.f32 %v220, %v221
    %v223 = vrot.slane %v222, 1
    %v224 = vadd.f32 %v222, %v223
    %vm227 = vcmask 1041409
    %v228 = vsel %vm227, %v224, %v155
    %v230 = vadd.f32 %v85, %v228
    %vm231 = vcmask 254976
    %232 = vst.msk [vmem:[#allocation2] sm:$0x3] %vm231, %v230
    // Predicated region
    $region18: #{tpu_custom_call.1} parent=1 // pred_check
      %p233 = pneg %p15
    $region19: #{tpu_custom_call.1} parent=1 // pred_check_branch
      %235 = sbr.rel (%p233) target = $region21
    $region20: #{tpu_custom_call.1} parent=1 // pred_region
      %v236 = vld [vmem:[#allocation2] sm:$0x3]
      %v237 = vmul.f32 %v236, 0.00390625
      %v238 = vld [vmem:[%s1] sm:$0xff]
      %v239 = vld [vmem:[%s1 + $0x8] sm:$0xff]
      %v240 = vld [vmem:[%s1 + $0x10] sm:$0xff]
      %v241 = vld [vmem:[%s1 + $0x18] sm:$0xff]
      %v242 = vld [vmem:[%s2] sm:$0x1]
      %v244 = vlaneseq
      %v245 = vshrl.u32 %v244, 7
      %v246 = vsub.s32 0, %v245
      %v247 = vrot.slane %v242, %v246
      %v250 = vsel %vm86, %v237, 0
      %252 = vmatprep.subr.mxu0 0.0
      %253 = vmatpush1.msra.mxu0 %v238
      %254 = vmatprep.subr.mxu0 0.0
      %255 = vmatpush1.msra.mxu0 %v239
      %256 = vmatprep.subr.mxu0 0.0
      %257 = vmatpush1.msra.mxu0 %v240
      %258 = vmatprep.subr.mxu0 0.0
      %259 = vmatpush1.msra.mxu0 %v241
      %260 = vmatprep.subr.mxu0 0.0
      %261 = vmatpush1.msra.mxu0 0.0
      %262 = vmatprep.subr.mxu0 0.0
      %263 = vmatpush1.msra.mxu0 0.0
      %264 = vmatprep.subr.mxu0 0.0
      %265 = vmatpush1.msra.mxu0 0.0
      %266 = vmatprep.subr.mxu0 0.0
      %267 = vmatpush1.msra.mxu0 0.0
      %268 = vmatprep.subr.mxu0 0.0
      %269 = vmatpush1.msra.mxu0 0.0
      %270 = vmatprep.subr.mxu0 0.0
      %271 = vmatpush1.msra.mxu0 0.0
      %272 = vmatprep.subr.mxu0 0.0
      %273 = vmatpush1.msra.mxu0 0.0
      %274 = vmatprep.subr.mxu0 0.0
      %275 = vmatpush1.msra.mxu0 0.0
      %276 = vmatprep.subr.mxu0 0.0
      %277 = vmatpush1.msra.mxu0 0.0
      %278 = vmatprep.subr.mxu0 0.0
      %279 = vmatpush1.msra.mxu0 0.0
      %280 = vmatprep.subr.mxu0 0.0
      %281 = vmatpush1.msra.mxu0 0.0
      %282 = vmatprep.subr.mxu0 0.0
      %283 = vmatpush1.msra.mxu0 0.0
      %284 = vmatprep.subr.mxu0 0.0
      %285 = vmatpush1.msra.mxu0 0.0
      %286 = vmatprep.subr.mxu0 0.0
      %287 = vmatpush1.msra.mxu0 0.0
      %288 = vmatprep.subr.mxu0 0.0
      %289 = vmatpush1.msra.mxu0 0.0
      %290 = vmatprep.subr.mxu0 0.0
      %291 = vmatpush1.msra.mxu0 0.0
      %292 = vmatprep.subr.mxu0 0.0
      %293 = vmatpush1.msra.mxu0 0.0
      %294 = vmatprep.subr.mxu0 0.0
      %295 = vmatpush1.msra.mxu0 0.0
      %296 = vmatprep.subr.mxu0 0.0
      %297 = vmatpush1.msra.mxu0 0.0
      %298 = vmatprep.subr.mxu0 0.0
      %299 = vmatpush1.msra.mxu0 0.0
      %300 = vmatprep.subr.mxu0 0.0
      %301 = vmatpush1.msra.mxu0 0.0
      %302 = vmatprep.subr.mxu0 0.0
      %303 = vmatpush1.msra.mxu0 0.0
      %304 = vmatprep.subr.mxu0 0.0
      %305 = vmatpush1.msra.mxu0 0.0
      %306 = vmatprep.subr.mxu0 0.0
      %307 = vmatpush1.msra.mxu0 0.0
      %308 = vmatprep.subr.mxu0 0.0
      %309 = vmatpush1.msra.mxu0 0.0
      %310 = vmatprep.subr.mxu0 0.0
      %311 = vmatpush1.msra.mxu0 0.0
      %312 = vmatprep.subr.mxu0 0.0
      %313 = vmatpush1.msra.mxu0 0.0
      %314 = vmatprep.subr.mxu0 0.0
      %315 = vmatpush1.msra.mxu0 0.0
      %316 = vmatprep.mubr.f32.mxu0 0.0
      %317 = vmatmul.mubr.f32.gmra.mrb[0].mxu0 %v250
      %v318 = vpop.f32.mrb[0].mxu0
      %v319 = vadd.f32 %v247, %v318
      %v320 = vpop.f32.mrb[0].mxu0
      %321 = vdwg.mxu0
      %322 = vst [vmem:[#allocation3] sm:$0x3] %v319
    $region21: #{tpu_custom_call.1} parent=1 // pred_fallthru
      _
    // Predicated region
    $region22: #{tpu_custom_call.1} parent=1 // pred_check
      _
    $region23: #{tpu_custom_call.1} parent=1 // pred_check_branch
      %324 = sbr.rel (0) target = $region25
    $region24: #{tpu_custom_call.1} parent=1 // pred_region
      %s326 = ssub.s32 32, 32
      %327 = vsyncadd [#allocation4], %s326
      %s329 = sshll.u32 [#allocation3], 4
      %s330 = int_to_ptr.vmem [resolvable:$true] %s329
      %332 = dma.vmem_to_hbm [thread:$0]  %s330, 32, %s3, [#allocation4]
    $region25: #{tpu_custom_call.1} parent=1 // pred_fallthru
      _
    // Predicated region
    $region26: #{tpu_custom_call.1} parent=1 // pred_check
      _
    $region27: #{tpu_custom_call.1} parent=1 // pred_check_branch
      %334 = sbr.rel (0) target = $region29
    $region28: #{tpu_custom_call.1} parent=1 // pred_region
      %335 = dma.done [#allocation4], 32
    $region29: #{tpu_custom_call.1} parent=1 // pred_fallthru
      _
    %336 = vsyncpa [#allocation4], 1

</llo_original>
